<compile_context>
chip_gen: v5e
topology: v5e:2x2
jax: 0.10.0
libtpu: 0.0.40
codegen_flags: <defaults>
</compile_context>

<pallas_src>
import jax
import jax.numpy as jnp
from jax.experimental import pallas as pl
from jax.experimental.pallas import tpu as pltpu

IN_F = 64
HID_F = 128
OUT_F = 64


def _round_up(n, m):
    return (n + m - 1) // m * m


def _fused_kernel(x_ref, w_ref, b_ref, out_ref):
    # Single fused matmul: out = x @ W_fused + b_fused  ->  (tile, 128)
    out_ref[...] = (
        jnp.dot(x_ref[...], w_ref[...], preferred_element_type=jnp.float32)
        + b_ref[...]
    ).astype(out_ref.dtype)


def fold_params(w1, b1, w2, b2):
    """One-time weight folding (do at model-build time, not per forward).

    w1: (128, 64); b1: (128,); w2: (64, 128); b2: (64,)
    Returns w_fused: (64, 128), b_fused: (1, 128).
    """
    hp = jax.lax.Precision.HIGHEST
    # pad_cols(W2^T): (128, 128) with zero columns 64..127
    w2t_pad = jnp.zeros((HID_F, HID_F), jnp.float32).at[:, :OUT_F].set(w2.T)
    mix = jnp.eye(HID_F, dtype=jnp.float32) + w2t_pad            # (128, 128)
    w_fused = jnp.dot(w1.T, mix, precision=hp)                   # (64, 128)
    b_fused = (jnp.dot(b1, mix, precision=hp)
               + jnp.pad(b2, (0, HID_F - OUT_F)))                # (128,)
    return w_fused, b_fused.reshape(1, HID_F)


def fused_forward(x, w_fused, b_fused, *, tm=2048):
    """x: (B, 64) -> (B, 128)."""
    B = x.shape[0]

    # Tile choice:
    #  * rows rounded up to a multiple of 8 (sublane-aligned stores),
    #  * >= 2 grid steps whenever B > 8 so both v7x TensorCores get work,
    #  * capped at tm (2048 ~= 1.5 MiB/step of x+out, double-buffered ~3 MiB,
    #    comfortably inside v5e's 16 MiB default scoped VMEM).
    if B > 8:
        tile = min(tm, _round_up(pl.cdiv(B, 2), 8))
    else:
        tile = _round_up(max(B, 1), 8)
    grid = (pl.cdiv(B, tile),)

    cost = pl.CostEstimate(
        flops=2 * B * IN_F * HID_F,
        transcendentals=0,
        bytes_accessed=4 * (B * IN_F + IN_F * HID_F + HID_F + B * HID_F),
    )

    # No wrapper-side padding / slicing: Pallas pads the ragged last block on
    # read and masks the final store.
    return pl.pallas_call(
        _fused_kernel,
        out_shape=jax.ShapeDtypeStruct((B, HID_F), jnp.float32),
        grid=grid,
        in_specs=[
            pl.BlockSpec((tile, IN_F), lambda i: (i, 0)),     # batch-tiled x
            pl.BlockSpec((IN_F, HID_F), lambda i: (0, 0)),    # resident weight
            pl.BlockSpec((1, HID_F), lambda i: (0, 0)),       # resident bias
        ],
        out_specs=pl.BlockSpec((tile, HID_F), lambda i: (i, 0)),
        compiler_params=pltpu.CompilerParams(
            dimension_semantics=("parallel",)),
        cost_estimate=cost,
    )(x, w_fused, b_fused)


def reference(x, w1, b1, w2, b2):
    hp = jax.lax.Precision.HIGHEST
    x1 = jnp.dot(x, w1.T, precision=hp) + b1
    x2 = jnp.dot(x1, w2.T, precision=hp) + b2
    return x1 + jnp.concatenate([x2, jnp.zeros_like(x2)], axis=-1)


if __name__ == "__main__":
    key = jax.random.PRNGKey(0)
    kx, kw1, kb1, kw2, kb2 = jax.random.split(key, 5)

    B = 8
    x = jax.random.normal(kx, (B, IN_F), dtype=jnp.float32)

    # Deterministic parameter init (nn.Linear-style uniform bounds).
    lim1 = 1.0 / (IN_F ** 0.5)
    lim2 = 1.0 / (HID_F ** 0.5)
    w1 = jax.random.uniform(kw1, (HID_F, IN_F), jnp.float32, -lim1, lim1)
    b1 = jax.random.uniform(kb1, (HID_F,), jnp.float32, -lim1, lim1)
    w2 = jax.random.uniform(kw2, (OUT_F, HID_F), jnp.float32, -lim2, lim2)
    b2 = jax.random.uniform(kb2, (OUT_F,), jnp.float32, -lim2, lim2)

    # One-time fold (model-build time), then run the kernel.
    w_fused, b_fused = fold_params(w1, b1, w2, b2)
    w_fused, b_fused = jax.block_until_ready((w_fused, b_fused))

    out = fused_forward(x, w_fused, b_fused)
    jax.block_until_ready(out)

    ref = reference(x, w1, b1, w2, b2)
    assert out.shape == (B, HID_F)
    assert jnp.allclose(out, ref, atol=1e-4, rtol=1e-4), (
        float(jnp.max(jnp.abs(out - ref))))

    print("KERNEL_OK")
</pallas_src>

<mosaic_0001>
module attributes {stable_mosaic.version = 11 : i64} {
  func.func @_fused_kernel(%arg0: i32, %arg1: memref<8x64xf32, #tpu.memory_space<vmem>>, %arg2: memref<64x128xf32, #tpu.memory_space<vmem>>, %arg3: memref<1x128xf32, #tpu.memory_space<vmem>>, %arg4: memref<8x128xf32, #tpu.memory_space<vmem>>) attributes {dimension_semantics = [#tpu.dimension_semantics<parallel>], iteration_bounds = array<i64: 1>, scalar_prefetch = 0 : i64, scratch_operands = 0 : i64, tpu.core_type = #tpu.core_type<tc>, window_params = [{transform_indices = @transform_0, window_bounds = array<i64: 8, 64>}, {pipeline_mode = #tpu.pipeline_mode<synchronous>, transform_indices = @transform_1, window_bounds = array<i64: 64, 128>}, {pipeline_mode = #tpu.pipeline_mode<synchronous>, transform_indices = @transform_2, window_bounds = array<i64: 1, 128>}, {transform_indices = @transform_3, window_bounds = array<i64: 8, 128>}]} {
    %c0 = arith.constant 0 : index
    %c0_0 = arith.constant 0 : index
    %0 = vector.load %arg1[%c0, %c0_0] : memref<8x64xf32, #tpu.memory_space<vmem>>, vector<8x64xf32>
    %c0_1 = arith.constant 0 : index
    %c0_2 = arith.constant 0 : index
    %1 = vector.load %arg2[%c0_1, %c0_2] : memref<64x128xf32, #tpu.memory_space<vmem>>, vector<64x128xf32>
    %cst = arith.constant dense<0.000000e+00> : vector<8x128xf32>
    %2 = tpu.matmul %0, %1, %cst {dimension_numbers = #tpu.dot_dimension_numbers<[1], [0], [0], [1], [0, 0, 1, 1], [], []>} : vector<8x64xf32>, vector<64x128xf32>, vector<8x128xf32> -> vector<8x128xf32>
    %c0_3 = arith.constant 0 : index
    %c0_4 = arith.constant 0 : index
    %3 = vector.load %arg3[%c0_3, %c0_4] : memref<1x128xf32, #tpu.memory_space<vmem>>, vector<1x128xf32>
    %4 = vector.broadcast %3 : vector<1x128xf32> to vector<8x128xf32>
    %5 = arith.addf %2, %4 : vector<8x128xf32>
    %c0_5 = arith.constant 0 : index
    %c0_6 = arith.constant 0 : index
    %6 = vector.load %arg4[%c0_5, %c0_6] : memref<8x128xf32, #tpu.memory_space<vmem>>, vector<8x128xf32>
    tpu.vector_store %arg4[%c0_5, %c0_6], %5 {strides = array<i32>} : memref<8x128xf32, #tpu.memory_space<vmem>>, vector<8x128xf32>,
    return
  }
  func.func @transform_0(%arg0: i32) -> (i32, i32) {
    %c0_i32 = arith.constant 0 : i32
    %c0_i32_0 = arith.constant 0 : i32
    return %arg0, %c0_i32 : i32, i32
  }
  func.func @transform_1(%arg0: i32) -> (i32, i32) {
    %c0_i32 = arith.constant 0 : i32
    %c0_i32_0 = arith.constant 0 : i32
    %c0_i32_1 = arith.constant 0 : i32
    return %c0_i32, %c0_i32_0 : i32, i32
  }
  func.func @transform_2(%arg0: i32) -> (i32, i32) {
    %c0_i32 = arith.constant 0 : i32
    %c0_i32_0 = arith.constant 0 : i32
    %c0_i32_1 = arith.constant 0 : i32
    return %c0_i32, %c0_i32_0 : i32, i32
  }
  func.func @transform_3(%arg0: i32) -> (i32, i32) {
    %c0_i32 = arith.constant 0 : i32
    %c0_i32_0 = arith.constant 0 : i32
    return %arg0, %c0_i32 : i32, i32
  }
}

</mosaic_0001>

<llo_original>
// kernel: tpu_custom_call.1
$region0: #{tpu_custom_call.1}
  #allocation0 [shape = 'u32[]', space=smem, size = 0x4, offset = 0x4, fixed_abs, tag = 'smem constant byte address 0x4 - core index']
  #allocation1 [shape = 'u32[72,128]{1,0:T(1,128)}', space=vmem, size = 0x9000, scoped, tag = 'internal scratch']
  %s0 = inlined_call_operand.hbm [shape: f32[8,64], index: 0, kind: input, shape index: {}]
  %s1 = inlined_call_operand.hbm [shape: f32[64,128], index: 1, kind: input, shape index: {}]
  %s2 = inlined_call_operand.vmem [shape: f32[1,128], index: 2, kind: input, shape index: {}]
  %s3 = inlined_call_operand.hbm [shape: f32[8,128], index: 3, kind: output, shape index: {}]
  %s4 = sld [smem:[#allocation0]]
  $region30: #{tpu_custom_call.1} parent=0
    _
  %s6 = ssub.s32 1, %s4
  %s7 = scalar_select 0, %s6, %s4
  $region1: #{tpu_custom_call.1} parent=0
    #allocation2 [shape = 'u8[4096]{0}', space=vmem, size = 0x1000, scoped, tag = 'input window, operand 0, single buffered']
    #allocation3 [shape = 's32[1]{0}', space=sflag, size = 0x4, scoped, tag = 'scoped memory for tpu_custom_call.1']
    #allocation4 [shape = 's32[1]{0}', space=sflag, size = 0x4, scoped, tag = 'scoped memory for tpu_custom_call.1']
    #allocation5 [shape = 'u8[32768]{0}', space=vmem, size = 0x8000, scoped, tag = 'input window, operand 1, single buffered']
    #allocation6 [shape = 's32[1]{0}', space=sflag, size = 0x4, scoped, tag = 'scoped memory for tpu_custom_call.1']
    #allocation7 [shape = 'u8[4096]{0}', space=vmem, size = 0x1000, scoped, tag = 'output window, operand 0, single buffered']
    %8 = vsyncpa [#allocation3], 0
    %9 = vsyncpa [#allocation6], 0
    %10 = vsyncpa [#allocation4], 0
    // Predicated region
    $region2: #{tpu_custom_call.1} parent=1 // pred_check
      _
    $region3: #{tpu_custom_call.1} parent=1 // pred_check_branch
      %12 = sbr.rel (0) target = $region5
    $region4: #{tpu_custom_call.1} parent=1 // pred_region
      %14 = vsyncadd [#allocation3], 0
      %s16 = sshll.u32 %s0, 4
      %s17 = int_to_ptr.hbm [resolvable:$true] %s16
      %s18 = sshll.u32 [#allocation2], 4
      %s19 = int_to_ptr.vmem [resolvable:$true] %s18
      %21 = dma.hbm_to_vmem [thread:$0]  %s17, 128, %s19, [#allocation3]
    $region5: #{tpu_custom_call.1} parent=1 // pred_fallthru
      _
    // Predicated region
    $region6: #{tpu_custom_call.1} parent=1 // pred_check
      _
    $region7: #{tpu_custom_call.1} parent=1 // pred_check_branch
      %23 = sbr.rel (0) target = $region9
    $region8: #{tpu_custom_call.1} parent=1 // pred_region
      %25 = vsyncadd [#allocation6], 0
      %s26 = sshll.u32 %s1, 4
      %s27 = int_to_ptr.hbm [resolvable:$true] %s26
      %s28 = sshll.u32 [#allocation5], 4
      %s29 = int_to_ptr.vmem [resolvable:$true] %s28
      %34 = dma.hbm_to_vmem [thread:$0]  %s27, 1024, %s29, [#allocation6], 128, 128, 8
    $region9: #{tpu_custom_call.1} parent=1 // pred_fallthru
      _
    // Predicated region
    $region10: #{tpu_custom_call.1} parent=1 // pred_check
      _
    $region11: #{tpu_custom_call.1} parent=1 // pred_check_branch
      %36 = sbr.rel (0) target = $region13
    $region12: #{tpu_custom_call.1} parent=1 // pred_region
      _
    $region13: #{tpu_custom_call.1} parent=1 // pred_fallthru
      _
    // Predicated region
    $region14: #{tpu_custom_call.1} parent=1 // pred_check
      _
    $region15: #{tpu_custom_call.1} parent=1 // pred_check_branch
      %38 = sbr.rel (0) target = $region17
    $region16: #{tpu_custom_call.1} parent=1 // pred_region
      %40 = dma.done [#allocation3], 128
    $region17: #{tpu_custom_call.1} parent=1 // pred_fallthru
      _
    // Predicated region
    $region18: #{tpu_custom_call.1} parent=1 // pred_check
      _
    $region19: #{tpu_custom_call.1} parent=1 // pred_check_branch
      %42 = sbr.rel (0) target = $region21
    $region20: #{tpu_custom_call.1} parent=1 // pred_region
      %44 = dma.done [#allocation6], 1024
    $region21: #{tpu_custom_call.1} parent=1 // pred_fallthru
      _
    %v45 = vld [vmem:[#allocation2] sm:$0xff]
    %v46 = vld [vmem:[#allocation5] sm:$0xff]
    %v47 = vld [vmem:[#allocation5 + $0x8] sm:$0xff]
    %v48 = vld [vmem:[#allocation5 + $0x10] sm:$0xff]
    %v49 = vld [vmem:[#allocation5 + $0x18] sm:$0xff]
    %v50 = vld [vmem:[#allocation5 + $0x20] sm:$0xff]
    %v51 = vld [vmem:[#allocation5 + $0x28] sm:$0xff]
    %v52 = vld [vmem:[#allocation5 + $0x30] sm:$0xff]
    %v53 = vld [vmem:[#allocation5 + $0x38] sm:$0xff]
    %v54 = vld [vmem:[%s2] sm:$0x1]
    %v56 = vperm.slane %v54, 0
    %vm58 = vcmask 523264
    %v60 = vsel %vm58, %v45, 0
    %62 = vmatpush.msra.mxu0 0.0
    %63 = vmatpush.msra.mxu0 0.0
    %64 = vmatpush.msra.mxu0 0.0
    %65 = vmatpush.msra.mxu0 0.0
    %66 = vmatpush.msra.mxu0 0.0
    %67 = vmatpush.msra.mxu0 0.0
    %68 = vmatpush.msra.mxu0 0.0
    %69 = vmatpush.msra.mxu0 0.0
    %70 = vmatpush.msra.mxu0 %v53
    %71 = vmatpush.msra.mxu0 %v52
    %72 = vmatpush.msra.mxu0 %v51
    %73 = vmatpush.msra.mxu0 %v50
    %74 = vmatpush.msra.mxu0 %v49
    %75 = vmatpush.msra.mxu0 %v48
    %76 = vmatpush.msra.mxu0 %v47
    %77 = vmatpush.msra.mxu0 %v46
    %78 = vmatmul.f32.gmra.mxu0 %v60
    %v79 = vpop.f32.mrf.mxu0
    %v80 = vadd.f32 %v56, %v79
    %81 = vdwg.mxu0
    %82 = vst [vmem:[#allocation7] sm:$0xff] %v80
    // Predicated region
    $region22: #{tpu_custom_call.1} parent=1 // pred_check
      _
    $region23: #{tpu_custom_call.1} parent=1 // pred_check_branch
      %84 = sbr.rel (0) target = $region25
    $region24: #{tpu_custom_call.1} parent=1 // pred_region
      %86 = vsyncadd [#allocation4], 0
      %s88 = sshll.u32 [#allocation7], 4
      %s89 = int_to_ptr.vmem [resolvable:$true] %s88
      %s90 = sshll.u32 %s3, 4
      %s91 = int_to_ptr.hbm [resolvable:$true] %s90
      %93 = dma.vmem_to_hbm [thread:$0]  %s89, 128, %s91, [#allocation4]
    $region25: #{tpu_custom_call.1} parent=1 // pred_fallthru
      _
    // Predicated region
    $region26: #{tpu_custom_call.1} parent=1 // pred_check
      _
    $region27: #{tpu_custom_call.1} parent=1 // pred_check_branch
      %95 = sbr.rel (0) target = $region29
    $region28: #{tpu_custom_call.1} parent=1 // pred_region
      %97 = dma.done [#allocation4], 128
    $region29: #{tpu_custom_call.1} parent=1 // pred_fallthru
      _
    %98 = vsyncpa [#allocation3], 1
    %99 = vsyncpa [#allocation6], 1
    %100 = vsyncpa [#allocation4], 1

</llo_original>
